<compile_context>
chip_gen: v6e
topology: v6e:2x2x1
jax: 0.10.0
libtpu: 0.0.40
codegen_flags: <defaults>
</compile_context>

<pallas_src>
import functools

import jax
import jax.numpy as jnp
from jax import lax
from jax.experimental import pallas as pl
from jax.experimental.pallas import tpu as pltpu


def _epilogue(z, b, mul, o_ref):
    """z: (tm, tk) f32 pre-activation; b: (1, tk); mul: (tm, tk)."""
    z = z + b.astype(jnp.float32)
    # Exact sigmoid: exp runs on the EUP; the divide is exact (strict numerical parity
    # with torch.nn.SiLU).  Epilogue runs once per output tile, so cost is negligible.
    sig = 1.0 / (1.0 + jnp.exp(-z))
    o_ref[...] = (z * sig * mul.astype(jnp.float32)).astype(o_ref.dtype)


def _addmm_bias_silu_mul_kernel(x_ref, w_ref, b_ref, mul_ref, o_ref, *scratch,
                                n_total, tn, mask_n, single_step):
    # x_ref:   (TM, TN)  input tile              (contraction dim = lanes)
    # w_ref:   (TK, TN)  weight tile, native [K, N] layout
    # b_ref:   (1,  TK)  bias tile
    # mul_ref: (TM, TK)  elementwise multiplier tile
    # o_ref:   (TM, TK)  output tile
    # scratch: ()        if single_step else (acc_ref (TM, TK) f32,)

    def contract(x, w):
        # Contract N (dim 1 of both operands): (TM, TN) x (TK, TN) -> (TM, TK) on MXU.
        return lax.dot_general(
            x, w,
            dimension_numbers=(((1,), (1,)), ((), ())),
            preferred_element_type=jnp.float32,
        )

    def masked_operands(n_idx):
        # Only the padded tail of the final N block needs zeroing; build the mask from
        # a (1, TN) iota and let jnp.where broadcast it over the sublane dim.
        x = x_ref[...]
        w = w_ref[...]
        col = n_idx * tn + lax.broadcasted_iota(jnp.int32, (1, tn), 1)
        valid = col < n_total
        x = jnp.where(valid, x, jnp.zeros_like(x))
        w = jnp.where(valid, w, jnp.zeros_like(w))
        return x, w

    if single_step:
        # gn == 1: no accumulator scratch, no RMW -- compute and write in one shot.
        if mask_n:  # (cannot happen with the wrapper's tile clamping, kept for safety)
            x, w = masked_operands(0)
        else:
            x, w = x_ref[...], w_ref[...]
        _epilogue(contract(x, w), b_ref[...], mul_ref[...], o_ref)
        return

    (acc_ref,) = scratch
    n_idx = pl.program_id(2)
    last = pl.num_programs(2) - 1

    @pl.when(n_idx == 0)
    def _init():
        acc_ref[...] = jnp.zeros_like(acc_ref)

    if mask_n:
        # Hot steps: plain MAC, no mask work.
        @pl.when(n_idx != last)
        def _step():
            acc_ref[...] += contract(x_ref[...], w_ref[...])

        # Only the final N block is padded past the true contraction length.
        @pl.when(n_idx == last)
        def _masked_step():
            x, w = masked_operands(n_idx)
            acc_ref[...] += contract(x, w)
    else:
        acc_ref[...] += contract(x_ref[...], w_ref[...])

    @pl.when(n_idx == last)
    def _finalize():
        _epilogue(acc_ref[...], b_ref[...], mul_ref[...], o_ref)


def _fit_tile(tile, dim, align):
    """Clamp a tile size: full dim if it fits, else an `align`-multiple <= tile."""
    if dim <= tile:
        return dim
    return max(align, (tile // align) * align)


def addmm_1dbias_silu_mul(inp, weight, bias, mul_tensor, *,
                          tm=512, tk=512, tn=2048, mxu_dtype=None):
    """inp: [M, N]; weight: [K, N] (PyTorch Linear layout); bias: [K]; mul: [M, K].

    mxu_dtype: optional explicit opt-in (e.g. jnp.bfloat16) to feed the MXU with
    narrower operands; accumulation stays f32.  Default None = exact f32 operands.
    """
    M, N = inp.shape
    K, N_w = weight.shape
    assert N == N_w and bias.shape == (K,) and mul_tensor.shape == (M, K)

    out_dtype = jnp.result_type(inp.dtype, mul_tensor.dtype)

    # Optional bf16 MXU feed (cast once in the wrapper: also halves streamed HBM bytes).
    x_in = inp if mxu_dtype is None else inp.astype(mxu_dtype)
    w_in = weight if mxu_dtype is None else weight.astype(mxu_dtype)

    tm = _fit_tile(tm, M, 8)      # sublane dim of x / mul / out tiles
    tk = _fit_tile(tk, K, 128)    # lane dim of out / mul / bias; sublane dim of w
    tn = _fit_tile(tn, N, 128)    # lane (contraction) dim of x / w

    # v7x has 2 TensorCores sharing the "parallel" grid axes: if the whole output
    # collapses to one (i, j) tile, split it so the second core is not idle.
    if pl.cdiv(M, tm) * pl.cdiv(K, tk) == 1:
        if K >= 256:
            tk = max(128, 128 * pl.cdiv(pl.cdiv(K, 2), 128))
        elif M >= 16:
            tm = max(8, 8 * pl.cdiv(pl.cdiv(M, 2), 8))

    mask_n = (N % tn) != 0
    gm, gk, gn = pl.cdiv(M, tm), pl.cdiv(K, tk), pl.cdiv(N, tn)
    single_step = gn == 1

    b2d = bias.reshape(1, K)      # keep bias 2-D (lane-major)

    x_item = jnp.dtype(x_in.dtype).itemsize
    w_item = jnp.dtype(w_in.dtype).itemsize
    b_item = jnp.dtype(bias.dtype).itemsize
    m_item = jnp.dtype(mul_tensor.dtype).itemsize
    o_item = jnp.dtype(out_dtype).itemsize

    # Double-buffered I/O tiles (+ f32 accumulator scratch when multi-step).
    vmem_need = (2 * (tm * tn * x_item + tk * tn * w_item + tk * b_item
                      + tm * tk * (m_item + o_item))
                 + (0 if single_step else tm * tk * 4))
    try:
        vmem_cap = int(pltpu.get_tpu_info().vmem_capacity_bytes) * 3 // 4
    except Exception:
        vmem_cap = 48 << 20        # conservative fallback (fits v7x's 64 MiB/TC)
    vmem_limit = int(min(vmem_cap, max(32 << 20, 2 * vmem_need)))

    cost = pl.CostEstimate(
        flops=2 * M * N * K,
        transcendentals=M * K,                       # one exp per output element
        bytes_accessed=(gk * M * N * x_item          # input re-streamed per K tile
                        + gm * K * N * w_item        # weight re-streamed per M tile
                        + K * b_item
                        + M * K * (m_item + o_item)),
    )

    kernel = functools.partial(
        _addmm_bias_silu_mul_kernel,
        n_total=N, tn=tn, mask_n=mask_n, single_step=single_step)

    scratch = [] if single_step else [pltpu.VMEM((tm, tk), jnp.float32)]

    return pl.pallas_call(
        kernel,
        out_shape=jax.ShapeDtypeStruct((M, K), out_dtype),
        grid_spec=pltpu.PrefetchScalarGridSpec(
            num_scalar_prefetch=0,
            grid=(gm, gk, gn),                        # reduction axis (N) last
            in_specs=[
                pl.BlockSpec((tm, tn), lambda i, j, n: (i, n)),   # inp tile
                pl.BlockSpec((tk, tn), lambda i, j, n: (j, n)),   # weight tile [K, N]
                pl.BlockSpec((1, tk), lambda i, j, n: (0, j)),    # bias tile
                pl.BlockSpec((tm, tk), lambda i, j, n: (i, j)),   # mul tile
            ],
            out_specs=pl.BlockSpec((tm, tk), lambda i, j, n: (i, j)),
            scratch_shapes=scratch,
        ),
        compiler_params=pltpu.CompilerParams(
            dimension_semantics=("parallel", "parallel", "arbitrary"),
            vmem_limit_bytes=vmem_limit,
        ),
        cost_estimate=cost,
    )(x_in, w_in, b2d, mul_tensor)


def _reference(inp, weight, bias, mul_tensor):
    z = jnp.dot(inp, weight.T, precision=lax.Precision.HIGHEST) + bias
    return (z * jax.nn.sigmoid(z)) * mul_tensor


if __name__ == "__main__":
    key = jax.random.PRNGKey(0)

    def run_case(M, N, K, case_key, atol, rtol, mxu_dtype=None, **tiles):
        k_w, k_b, k_x, k_m = jax.random.split(case_key, 4)
        # Deterministic init mimicking nn.Linear's uniform(-1/sqrt(n), 1/sqrt(n)).
        bound = 1.0 / (N ** 0.5)
        weight = jax.random.uniform(k_w, (K, N), jnp.float32, -bound, bound)  # [K, N]
        bias = jax.random.uniform(k_b, (K,), jnp.float32, -bound, bound)      # [K]
        inp = jax.random.normal(k_x, (M, N), jnp.float32)
        mul_tensor = jax.random.normal(k_m, (M, K), jnp.float32)

        out = jax.block_until_ready(
            addmm_1dbias_silu_mul(inp, weight, bias, mul_tensor,
                                  mxu_dtype=mxu_dtype, **tiles))
        if mxu_dtype is None:
            inp_r, w_r = inp, weight
        else:
            # Compare against a reference whose operands were rounded the same way,
            # so only the (f32) accumulation order differs.
            inp_r = inp.astype(mxu_dtype).astype(jnp.float32)
            w_r = weight.astype(mxu_dtype).astype(jnp.float32)
        ref = _reference(inp_r, w_r, bias, mul_tensor)
        assert out.shape == ref.shape and out.dtype == ref.dtype
        assert jnp.allclose(out, ref, atol=atol, rtol=rtol), \
            f"mismatch {M}x{N}x{K} (mxu_dtype={mxu_dtype})"

    k1, k2, k3 = jax.random.split(key, 3)
    # Small single-N-step path (gn == 1, no accumulator scratch) + 2-core output split.
    run_case(32, 64, 128, k1, atol=2e-3, rtol=2e-3)
    # Multi-tile path: remainder M tile, masked (padded) final N block, 3 K tiles.
    run_case(136, 200, 384, k2, atol=2e-3, rtol=2e-3, tm=128, tk=128, tn=128)
    # Explicit bf16 MXU feed (native bf16 matmul, f32 accumulation) on the multi-step path.
    run_case(64, 256, 256, k3, atol=1e-2, rtol=1e-2,
             mxu_dtype=jnp.bfloat16, tm=64, tk=128, tn=128)

    print("KERNEL_OK")
</pallas_src>

<mosaic_0001>
module attributes {stable_mosaic.version = 11 : i64} {
  func.func @_addmm_bias_silu_mul_kernel(%arg0: i32, %arg1: i32, %arg2: i32, %arg3: memref<16x64xf32, #tpu.memory_space<vmem>>, %arg4: memref<128x64xf32, #tpu.memory_space<vmem>>, %arg5: memref<1x128xf32, #tpu.memory_space<vmem>>, %arg6: memref<16x128xf32, #tpu.memory_space<vmem>>, %arg7: memref<16x128xf32, #tpu.memory_space<vmem>>) attributes {dimension_semantics = [#tpu.dimension_semantics<parallel>, #tpu.dimension_semantics<parallel>, #tpu.dimension_semantics<arbitrary>], iteration_bounds = array<i64: 2, 1, 1>, scalar_prefetch = 0 : i64, scratch_operands = 0 : i64, tpu.core_type = #tpu.core_type<tc>, window_params = [{transform_indices = @transform_0, window_bounds = array<i64: 16, 64>}, {transform_indices = @transform_1, window_bounds = array<i64: 128, 64>}, {transform_indices = @transform_2, window_bounds = array<i64: 1, 128>}, {transform_indices = @transform_3, window_bounds = array<i64: 16, 128>}, {transform_indices = @transform_4, window_bounds = array<i64: 16, 128>}]} {
    %c0 = arith.constant 0 : index
    %c0_0 = arith.constant 0 : index
    %0 = vector.load %arg3[%c0, %c0_0] : memref<16x64xf32, #tpu.memory_space<vmem>>, vector<16x64xf32>
    %c0_1 = arith.constant 0 : index
    %c0_2 = arith.constant 0 : index
    %1 = vector.load %arg4[%c0_1, %c0_2] : memref<128x64xf32, #tpu.memory_space<vmem>>, vector<128x64xf32>
    %cst = arith.constant dense<0.000000e+00> : vector<16x128xf32>
    %2 = tpu.matmul %0, %1, %cst {dimension_numbers = #tpu.dot_dimension_numbers<[1], [1], [0], [0], [0, 0, 1, 0], [], []>} : vector<16x64xf32>, vector<128x64xf32>, vector<16x128xf32> -> vector<16x128xf32>
    %c0_3 = arith.constant 0 : index
    %c0_4 = arith.constant 0 : index
    %3 = vector.load %arg5[%c0_3, %c0_4] : memref<1x128xf32, #tpu.memory_space<vmem>>, vector<1x128xf32>
    %c0_5 = arith.constant 0 : index
    %c0_6 = arith.constant 0 : index
    %4 = vector.load %arg6[%c0_5, %c0_6] : memref<16x128xf32, #tpu.memory_space<vmem>>, vector<16x128xf32>
    %5 = vector.broadcast %3 : vector<1x128xf32> to vector<16x128xf32>
    %6 = arith.addf %2, %5 : vector<16x128xf32>
    %cst_7 = arith.constant 0.000000e+00 : f32
    %7 = vector.broadcast %cst_7 : f32 to vector<16x128xf32>
    %8 = arith.subf %7, %6 : vector<16x128xf32>
    %9 = math.exp %8 : vector<16x128xf32>
    %cst_8 = arith.constant 1.000000e+00 : f32
    %10 = vector.broadcast %cst_8 : f32 to vector<16x128xf32>
    %11 = arith.addf %10, %9 : vector<16x128xf32>
    %cst_9 = arith.constant 1.000000e+00 : f32
    %12 = vector.broadcast %cst_9 : f32 to vector<16x128xf32>
    %13 = arith.divf %12, %11 : vector<16x128xf32>
    %14 = arith.mulf %6, %13 : vector<16x128xf32>
    %15 = arith.mulf %14, %4 : vector<16x128xf32>
    %c0_10 = arith.constant 0 : index
    %c0_11 = arith.constant 0 : index
    %16 = vector.load %arg7[%c0_10, %c0_11] : memref<16x128xf32, #tpu.memory_space<vmem>>, vector<16x128xf32>
    tpu.vector_store %arg7[%c0_10, %c0_11], %15 {strides = array<i32>} : memref<16x128xf32, #tpu.memory_space<vmem>>, vector<16x128xf32>,
    return
  }
  func.func @transform_0(%arg0: i32, %arg1: i32, %arg2: i32) -> (i32, i32) {
    %c0_i32 = arith.constant 0 : i32
    return %arg0, %arg2 : i32, i32
  }
  func.func @transform_1(%arg0: i32, %arg1: i32, %arg2: i32) -> (i32, i32) {
    %c0_i32 = arith.constant 0 : i32
    return %arg1, %arg2 : i32, i32
  }
  func.func @transform_2(%arg0: i32, %arg1: i32, %arg2: i32) -> (i32, i32) {
    %c0_i32 = arith.constant 0 : i32
    %c0_i32_0 = arith.constant 0 : i32
    return %c0_i32, %arg1 : i32, i32
  }
  func.func @transform_3(%arg0: i32, %arg1: i32, %arg2: i32) -> (i32, i32) {
    %c0_i32 = arith.constant 0 : i32
    return %arg0, %arg1 : i32, i32
  }
  func.func @transform_4(%arg0: i32, %arg1: i32, %arg2: i32) -> (i32, i32) {
    %c0_i32 = arith.constant 0 : i32
    return %arg0, %arg1 : i32, i32
  }
}

</mosaic_0001>

<llo_original>
// kernel: tpu_custom_call.1
$region0: #{tpu_custom_call.1}
  #allocation0 [shape = 'u32[]', space=smem, size = 0x4, offset = 0x4, fixed_abs, tag = 'smem constant byte address 0x4 - core index']
  #allocation1 [shape = 'u32[144,128]{1,0:T(1,128)}', space=vmem, size = 0x12000, scoped, tag = 'internal scratch']
  %s0 = inlined_call_operand.vmem [shape: f32[32,64], index: 0, kind: input, shape index: {}]
  %s1 = inlined_call_operand.vmem [shape: f32[128,64], index: 1, kind: input, shape index: {}]
  %s2 = inlined_call_operand.vmem [shape: f32[1,128], index: 2, kind: input, shape index: {}]
  %s3 = inlined_call_operand.vmem [shape: f32[32,128], index: 3, kind: input, shape index: {}]
  %s4 = inlined_call_operand.hbm [shape: f32[32,128], index: 4, kind: output, shape index: {}]
  %s5 = sld [smem:[#allocation0]]
  $region49: #{tpu_custom_call.1} parent=0
    _
  %s7 = ssub.s32 1, %s5
  %s8 = scalar_select 0, %s7, %s5
  $region1: #{tpu_custom_call.1} parent=0
    #allocation2 [shape = 'u8[16384]{0}', space=vmem, size = 0x4000, scoped, tag = 'output window, operand 0']
    #allocation3 [shape = 's32[2]{0}', space=sflag, size = 0x8, scoped, tag = 'scoped memory for tpu_custom_call.1']
    %9 = vsyncpa [#allocation3], 0
    %s10 = scalar_lea.sflag [#allocation3], 1
    %11 = vsyncpa %s10, 0
    loop: start=0, step=1, limit=4
    $region2: #{tpu_custom_call.1} parent=1 // loop_pre_header
      _
    $region3: #{tpu_custom_call.1} parent=1 // loop_header
      %s13 = sphi 0, %s17
      %p14 = scmp.ge.s32.totalorder %s13, 4
      %s20 = sphi 0, %s39
      %s21 = sphi 0, %s35
      %s22 = sphi 0, %s31
      %s23 = sphi 0, %s20
      %s24 = sphi 0, %s21
      %s25 = sphi 0, %s22
      %s26 = sphi 0, %s23
      %s27 = sphi 0, %s24
      %s28 = sphi 0, %s25
      %s44 = sphi 0, %s46
      %s47 = sphi 0, %s44
      %s48 = sphi 0, %s47
      %s64 = sphi 0, %s48
      %s72 = sphi 0, %s74
      %s75 = sphi 0, %s72
      %s76 = sphi 0, %s75
      %s92 = sphi 0, %s76
      %s98 = sphi 0, %s100
      %s101 = sphi 0, %s98
      %s102 = sphi 0, %s101
      %s118 = sphi 0, %s102
      %s126 = sphi 0, %s128
      %s129 = sphi 0, %s126
      %s130 = sphi 0, %s129
      %s146 = sphi 0, %s130
      %s154 = sphi 0, %s156
      %s157 = sphi 0, %s154
      %s158 = sphi 0, %s157
      %s174 = sphi 0, %s158
    $region4: #{tpu_custom_call.1} parent=1 // loop_header_branch
      %16 = sbr.rel (%p14) target = $region8
    $region5: #{tpu_custom_call.1} parent=1 // loop_body
      %s18 = ssub.s32 %s13, 1
      %s19 = ssub.s32 %s13, 2
      %s29 = sadd.s32 1, %s22
      %p30 = scmp.ge.s32.totalorder %s29, 1
      %s31 = scalar_select %p30, 0, %s29
      %s32 = sadd.s32 1, %s21
      %s33 = scalar_select %p30, %s32, %s21
      %p34 = scmp.ge.s32.totalorder %s33, 1
      %s35 = scalar_select %p34, 0, %s33
      %s36 = sadd.s32 1, %s20
      %s37 = scalar_select %p34, %s36, %s20
      %p38 = scmp.ge.s32.totalorder %s37, 2
      %s39 = scalar_select %p38, 0, %s37
      %s40 = ssub.s32 %s20, %s39
      %s41 = ssub.s32 %s22, %s31
      %s42 = sor.u32 %s40, %s41
      %p43 = scmp.eq.s32.totalorder %s42, 0
      %s45 = sadd.s32 %s44, 1
      %s46 = scalar_select %p43, %s44, %s45
      %p49 = pneg %p43
      %p50 = scmp.eq.s32.totalorder %s13, 1
      %p51 = por %p49, %p50
      %p52 = scmp.ne.s32.totalorder %s44, %s47
      %p53 = scmp.eq.s32.totalorder %s13, 0
      %p54 = por %p52, %p53
      %p55 = scmp.ne.s32.totalorder %s44, %s47
      %p56 = scmp.eq.s32.totalorder %s18, 1
      %p57 = por %p55, %p56
      %p58 = scmp.ne.s32.totalorder %s47, %s48
      %p59 = scmp.eq.s32.totalorder %s18, 0
      %p60 = por %p58, %p59
      %p61 = scmp.ne.s32.totalorder %s47, %s48
      %p62 = scmp.eq.s32.totalorder %s19, 1
      %p63 = por %p61, %p62
      %p65 = scmp.ne.s32.totalorder %s48, %s64
      %p66 = scmp.eq.s32.totalorder %s19, 0
      %p67 = por %p65, %p66
      %s68 = ssub.s32 %s21, %s35
      %s69 = ssub.s32 %s22, %s31
      %s70 = sor.u32 %s68, %s69
      %p71 = scmp.eq.s32.totalorder %s70, 0
      %s73 = sadd.s32 %s72, 1
      %s74 = scalar_select %p71, %s72, %s73
      %p77 = pneg %p71
      %p78 = scmp.eq.s32.totalorder %s13, 1
      %p79 = por %p77, %p78
      %p80 = scmp.ne.s32.totalorder %s72, %s75
      %p81 = scmp.eq.s32.totalorder %s13, 0
      %p82 = por %p80, %p81
      %p83 = scmp.ne.s32.totalorder %s72, %s75
      %p84 = scmp.eq.s32.totalorder %s18, 1
      %p85 = por %p83, %p84
      %p86 = scmp.ne.s32.totalorder %s75, %s76
      %p87 = scmp.eq.s32.totalorder %s18, 0
      %p88 = por %p86, %p87
      %p89 = scmp.ne.s32.totalorder %s75, %s76
      %p90 = scmp.eq.s32.totalorder %s19, 1
      %p91 = por %p89, %p90
      %p93 = scmp.ne.s32.totalorder %s76, %s92
      %p94 = scmp.eq.s32.totalorder %s19, 0
      %p95 = por %p93, %p94
      %s96 = ssub.s32 %s21, %s35
      %p97 = scmp.eq.s32.totalorder %s96, 0
      %s99 = sadd.s32 %s98, 1
      %s100 = scalar_select %p97, %s98, %s99
      %p103 = pneg %p97
      %p104 = scmp.eq.s32.totalorder %s13, 1
      %p105 = por %p103, %p104
      %p106 = scmp.ne.s32.totalorder %s98, %s101
      %p107 = scmp.eq.s32.totalorder %s13, 0
      %p108 = por %p106, %p107
      %p109 = scmp.ne.s32.totalorder %s98, %s101
      %p110 = scmp.eq.s32.totalorder %s18, 1
      %p111 = por %p109, %p110
      %p112 = scmp.ne.s32.totalorder %s101, %s102
      %p113 = scmp.eq.s32.totalorder %s18, 0
      %p114 = por %p112, %p113
      %p115 = scmp.ne.s32.totalorder %s101, %s102
      %p116 = scmp.eq.s32.totalorder %s19, 1
      %p117 = por %p115, %p116
      %p119 = scmp.ne.s32.totalorder %s102, %s118
      %p120 = scmp.eq.s32.totalorder %s19, 0
      %p121 = por %p119, %p120
      %s122 = ssub.s32 %s20, %s39
      %s123 = ssub.s32 %s21, %s35
      %s124 = sor.u32 %s122, %s123
      %p125 = scmp.eq.s32.totalorder %s124, 0
      %s127 = sadd.s32 %s126, 1
      %s128 = scalar_select %p125, %s126, %s127
      %p131 = pneg %p125
      %p132 = scmp.eq.s32.totalorder %s13, 1
      %p133 = por %p131, %p132
      %p134 = scmp.ne.s32.totalorder %s126, %s129
      %p135 = scmp.eq.s32.totalorder %s13, 0
      %p136 = por %p134, %p135
      %p137 = scmp.ne.s32.totalorder %s126, %s129
      %p138 = scmp.eq.s32.totalorder %s18, 1
      %p139 = por %p137, %p138
      %p140 = scmp.ne.s32.totalorder %s129, %s130
      %p141 = scmp.eq.s32.totalorder %s18, 0
      %p142 = por %p140, %p141
      %p143 = scmp.ne.s32.totalorder %s129, %s130
      %p144 = scmp.eq.s32.totalorder %s19, 1
      %p145 = por %p143, %p144
      %p147 = scmp.ne.s32.totalorder %s130, %s146
      %p148 = scmp.eq.s32.totalorder %s19, 0
      %p149 = por %p147, %p148
      %s150 = ssub.s32 %s20, %s39
      %s151 = ssub.s32 %s21, %s35
      %s152 = sor.u32 %s150, %s151
      %p153 = scmp.eq.s32.totalorder %s152, 0
      %s155 = sadd.s32 %s154, 1
      %s156 = scalar_select %p153, %s154, %s155
      %p159 = pneg %p153
      %p160 = scmp.eq.s32.totalorder %s13, 1
      %p161 = por %p159, %p160
      %p162 = scmp.ne.s32.totalorder %s154, %s157
      %p163 = scmp.eq.s32.totalorder %s13, 0
      %p164 = por %p162, %p163
      %p165 = scmp.ne.s32.totalorder %s154, %s157
      %p166 = scmp.eq.s32.totalorder %s18, 1
      %p167 = por %p165, %p166
      %p168 = scmp.ne.s32.totalorder %s157, %s158
      %p169 = scmp.eq.s32.totalorder %s18, 0
      %p170 = por %p168, %p169
      %p171 = scmp.ne.s32.totalorder %s157, %s158
      %p172 = scmp.eq.s32.totalorder %s19, 1
      %p173 = por %p171, %p172
      %p175 = scmp.ne.s32.totalorder %s158, %s174
      %p176 = scmp.eq.s32.totalorder %s19, 0
      %p177 = por %p175, %p176
      %p178 = scmp.le.s32.totalorder 1, %s13
      %p179 = scmp.lt.s32.totalorder %s13, 3
      %p180 = pnand %p178, %p179
      %p181 = pneg %p180
      // Predicated region
      $region9: #{tpu_custom_call.1} parent=5 // pred_check
        _
      $region10: #{tpu_custom_call.1} parent=5 // pred_check_branch
        %183 = sbr.rel (%p180) target = $region12
      $region11: #{tpu_custom_call.1} parent=5 // pred_region
        %s184 = ssub.s32 %s13, 1
        // Predicated region
        $region13: #{tpu_custom_call.1} parent=11 // pred_check
          %p185 = pneg %p88
        $region14: #{tpu_custom_call.1} parent=11 // pred_check_branch
          %187 = sbr.rel (%p185) target = $region16
        $region15: #{tpu_custom_call.1} parent=11 // pred_region
          %s188 = smul.u32 16, %s24
          %p189 = scmp.lt.s32.totalorder %s188, 15
          %s190 = scalar_select %p189, %s188, 15
          %p191 = scmp.lt.s32.totalorder %s25, 0
          %s192 = scalar_select %p191, %s25, 0
          %s193 = sadd.s32 %s192, %s190
          %s194 = smul.addr %s193, 8
          %s195 = scalar_lea.vmem %s1, %s194
          %s196 = smul.u32 16, %s24
        $region16: #{tpu_custom_call.1} parent=11 // pred_fallthru
          _
        // Predicated region
        $region17: #{tpu_custom_call.1} parent=11 // pred_check
          %p197 = pneg %p114
        $region18: #{tpu_custom_call.1} parent=11 // pred_check_branch
          %199 = sbr.rel (%p197) target = $region20
        $region19: #{tpu_custom_call.1} parent=11 // pred_region
          %p200 = scmp.lt.s32.totalorder %s24, 0
          %s201 = scalar_select %p200, %s24, 0
          %s202 = scalar_lea.vmem %s2, %s201
        $region20: #{tpu_custom_call.1} parent=11 // pred_fallthru
          _
      $region12: #{tpu_custom_call.1} parent=5 // pred_fallthru
        _
      %p203 = scmp.lt.s32.totalorder %s13, 2
      // Predicated region
      $region21: #{tpu_custom_call.1} parent=5 // pred_check
        %p204 = pneg %p203
      $region22: #{tpu_custom_call.1} parent=5 // pred_check_branch
        %206 = sbr.rel (%p204) target = $region24
      $region23: #{tpu_custom_call.1} parent=5 // pred_region
        // Predicated region
        $region25: #{tpu_custom_call.1} parent=23 // pred_check
          %p207 = pneg %p54
        $region26: #{tpu_custom_call.1} parent=23 // pred_check_branch
          %209 = sbr.rel (%p207) target = $region28
        $region27: #{tpu_custom_call.1} parent=23 // pred_region
          %s210 = smul.u32 2, %s20
          %p211 = scmp.lt.s32.totalorder %s210, 3
          %s212 = scalar_select %p211, %s210, 3
          %p213 = scmp.lt.s32.totalorder %s22, 0
          %s214 = scalar_select %p213, %s22, 0
          %s215 = sadd.s32 %s214, %s212
          %s216 = smul.addr %s215, 8
          %s217 = scalar_lea.vmem %s0, %s216
          %s218 = smul.u32 2, %s20
        $region28: #{tpu_custom_call.1} parent=23 // pred_fallthru
          _
        // Predicated region
        $region29: #{tpu_custom_call.1} parent=23 // pred_check
          %p219 = pneg %p136
        $region30: #{tpu_custom_call.1} parent=23 // pred_check_branch
          %221 = sbr.rel (%p219) target = $region32
        $region31: #{tpu_custom_call.1} parent=23 // pred_region
          %s222 = smul.u32 2, %s20
          %p223 = scmp.lt.s32.totalorder %s222, 3
          %s224 = scalar_select %p223, %s222, 3
          %p225 = scmp.lt.s32.totalorder %s21, 0
          %s226 = scalar_select %p225, %s21, 0
          %s227 = sadd.s32 %s226, %s224
          %s228 = smul.addr %s227, 8
          %s229 = scalar_lea.vmem %s3, %s228
          %s230 = smul.u32 2, %s20
        $region32: #{tpu_custom_call.1} parent=23 // pred_fallthru
          _
      $region24: #{tpu_custom_call.1} parent=5 // pred_fallthru
        _
      %p231 = scmp.le.s32.totalorder 1, %s13
      %p232 = scmp.lt.s32.totalorder %s13, 3
      %p233 = pnand %p231, %p232
      %p234 = pneg %p233
      // Predicated region
      $region33: #{tpu_custom_call.1} parent=5 // pred_check
        _
      $region34: #{tpu_custom_call.1} parent=5 // pred_check_branch
        %236 = sbr.rel (%p233) target = $region36
      $region35: #{tpu_custom_call.1} parent=5 // pred_region
        %s237 = ssub.s32 %s13, 1
        %s238 = smul.u32 2, %s23
        %p239 = scmp.lt.s32.totalorder %s238, 3
        %s240 = scalar_select %p239, %s238, 3
        %p241 = scmp.lt.s32.totalorder %s25, 0
        %s242 = scalar_select %p241, %s25, 0
        %s243 = sadd.s32 %s242, %s240
        %s244 = smul.addr %s243, 8
        %s245 = scalar_lea.vmem %s0, %s244
        %p246 = pneg %p60
        %p247 = pneg %p57
        %s248 = smul.u32 16, %s24
        %p249 = scmp.lt.s32.totalorder %s248, 15
        %s250 = scalar_select %p249, %s248, 15
        %p251 = scmp.lt.s32.totalorder %s25, 0
        %s252 = scalar_select %p251, %s25, 0
        %s253 = sadd.s32 %s252, %s250
        %s254 = smul.addr %s253, 8
        %s255 = scalar_lea.vmem %s1, %s254
        %p256 = pneg %p88
        %p257 = pneg %p85
        %p258 = scmp.lt.s32.totalorder %s24, 0
        %s259 = scalar_select %p258, %s24, 0
        %s260 = scalar_lea.vmem %s2, %s259
        %p261 = pneg %p114
        %p262 = pneg %p111
        %s263 = smul.u32 2, %s23
        %p264 = scmp.lt.s32.totalorder %s263, 3
        %s265 = scalar_select %p264, %s263, 3
        %p266 = scmp.lt.s32.totalorder %s24, 0
        %s267 = scalar_select %p266, %s24, 0
        %s268 = sadd.s32 %s267, %s265
        %s269 = smul.addr %s268, 8
        %s270 = scalar_lea.vmem %s3, %s269
        %p271 = pneg %p142
        %p272 = pneg %p139
        %p273 = pneg %p170
        %p274 = pneg %p167
        %s275 = sand.u32 %s157, 1
        %s276 = scalar_lea.sflag [#allocation3], %s275
        %s277 = sand.u32 %s157, 1
        %s278 = smul.addr %s277, 16
        %s279 = scalar_lea.vmem [#allocation2], %s278
        %s280 = smul.u32 2, %s23
        %p281 = scmp.lt.s32.totalorder %s280, 3
        %s282 = scalar_select %p281, %s280, 3
        %p283 = scmp.lt.s32.totalorder %s25, 0
        %s284 = scalar_select %p283, %s25, 0
        %s285 = sadd.s32 %s284, %s282
        %s286 = smul.addr %s285, 8
        %s287 = scalar_lea.vmem %s0, %s286
        %s288 = smul.u32 2, %s23
        %s289 = smul.u32 16, %s24
        %p290 = scmp.lt.s32.totalorder %s289, 15
        %s291 = scalar_select %p290, %s289, 15
        %p292 = scmp.lt.s32.totalorder %s25, 0
        %s293 = scalar_select %p292, %s25, 0
        %s294 = sadd.s32 %s293, %s291
        %s295 = smul.addr %s294, 8
        %s296 = scalar_lea.vmem %s1, %s295
        %s297 = smul.u32 16, %s24
        %p298 = scmp.lt.s32.totalorder %s24, 0
        %s299 = scalar_select %p298, %s24, 0
        %s300 = scalar_lea.vmem %s2, %s299
        %s301 = smul.u32 2, %s23
        %p302 = scmp.lt.s32.totalorder %s301, 3
        %s303 = scalar_select %p302, %s301, 3
        %p304 = scmp.lt.s32.totalorder %s24, 0
        %s305 = scalar_select %p304, %s24, 0
        %s306 = sadd.s32 %s305, %s303
        %s307 = smul.addr %s306, 8
        %s308 = scalar_lea.vmem %s3, %s307
        %s309 = smul.u32 2, %s23
        %s310 = smul.u32 2, %s23
        %v311 = vld [vmem:[%s287] sm:$0xff]
        %v312 = vld [vmem:[%s287 + $0x8] sm:$0xff]
        %v313 = vld [vmem:[%s296] sm:$0xff]
        %v314 = vld [vmem:[%s296 + $0x8] sm:$0xff]
        %v315 = vld [vmem:[%s296 + $0x10] sm:$0xff]
        %v316 = vld [vmem:[%s296 + $0x18] sm:$0xff]
        %v317 = vld [vmem:[%s296 + $0x20] sm:$0xff]
        %v318 = vld [vmem:[%s296 + $0x28] sm:$0xff]
        %v319 = vld [vmem:[%s296 + $0x30] sm:$0xff]
        %v320 = vld [vmem:[%s296 + $0x38] sm:$0xff]
        %v321 = vld [vmem:[%s296 + $0x40] sm:$0xff]
        %v322 = vld [vmem:[%s296 + $0x48] sm:$0xff]
        %v323 = vld [vmem:[%s296 + $0x50] sm:$0xff]
        %v324 = vld [vmem:[%s296 + $0x58] sm:$0xff]
        %v325 = vld [vmem:[%s296 + $0x60] sm:$0xff]
        %v326 = vld [vmem:[%s296 + $0x68] sm:$0xff]
        %v327 = vld [vmem:[%s296 + $0x70] sm:$0xff]
        %v328 = vld [vmem:[%s296 + $0x78] sm:$0xff]
        %v329 = vld [vmem:[%s300] sm:$0x1]
        %v330 = vld [vmem:[%s308] sm:$0xff]
        %v331 = vld [vmem:[%s308 + $0x8] sm:$0xff]
        %v333 = vlaneseq
        %v334 = vshrl.u32 %v333, 7
        %v335 = vsub.s32 0, %v334
        %v336 = vrot.slane %v329, %v335
        %vm338 = vcmask 523264
        %v340 = vsel %vm338, %v311, 0
        %v343 = vsel %vm338, %v312, 0
        %v346 = vsel %vm338, %v313, 0
        %v349 = vsel %vm338, %v314, 0
        %v352 = vsel %vm338, %v315, 0
        %v355 = vsel %vm338, %v316, 0
        %v358 = vsel %vm338, %v317, 0
        %v361 = vsel %vm338, %v318, 0
        %v364 = vsel %vm338, %v319, 0
        %v367 = vsel %vm338, %v320, 0
        %v370 = vsel %vm338, %v321, 0
        %v373 = vsel %vm338, %v322, 0
        %v376 = vsel %vm338, %v323, 0
        %v379 = vsel %vm338, %v324, 0
        %v382 = vsel %vm338, %v325, 0
        %v385 = vsel %vm338, %v326, 0
        %v388 = vsel %vm338, %v327, 0
        %v391 = vsel %vm338, %v328, 0
        %393 = vmatprep.subr.mxu0 0.0
        %394 = vmatpush1.xpose.msra.mxu0 %v391
        %395 = vmatprep.subr.mxu0 0.0
        %396 = vmatpush1.xpose.msra.mxu0 %v388
        %397 = vmatprep.subr.mxu0 0.0
        %398 = vmatpush1.xpose.msra.mxu0 %v385
        %399 = vmatprep.subr.mxu0 0.0
        %400 = vmatpush1.xpose.msra.mxu0 %v382
        %401 = vmatprep.subr.mxu0 0.0
        %402 = vmatpush1.xpose.msra.mxu0 %v379
        %403 = vmatprep.subr.mxu0 0.0
        %404 = vmatpush1.xpose.msra.mxu0 %v376
        %405 = vmatprep.subr.mxu0 0.0
        %406 = vmatpush1.xpose.msra.mxu0 %v373
        %407 = vmatprep.subr.mxu0 0.0
        %408 = vmatpush1.xpose.msra.mxu0 %v370
        %409 = vmatprep.subr.mxu0 0.0
        %410 = vmatpush1.xpose.msra.mxu0 %v367
        %411 = vmatprep.subr.mxu0 0.0
        %412 = vmatpush1.xpose.msra.mxu0 %v364
        %413 = vmatprep.subr.mxu0 0.0
        %414 = vmatpush1.xpose.msra.mxu0 %v361
        %415 = vmatprep.subr.mxu0 0.0
        %416 = vmatpush1.xpose.msra.mxu0 %v358
        %417 = vmatprep.subr.mxu0 0.0
        %418 = vmatpush1.xpose.msra.mxu0 %v355
        %419 = vmatprep.subr.mxu0 0.0
        %420 = vmatpush1.xpose.msra.mxu0 %v352
        %421 = vmatprep.subr.mxu0 0.0
        %422 = vmatpush1.xpose.msra.mxu0 %v349
        %423 = vmatprep.subr.mxu0 0.0
        %424 = vmatpush1.xpose.msra.mxu0 %v346
        %425 = vmatprep.subr.mxu0 0.0
        %426 = vmatpush2.xpose.msra.mxu0 0.0
        %427 = vmatprep.subr.mxu0 0.0
        %428 = vmatpush2.xpose.msra.mxu0 0.0
        %429 = vmatprep.subr.mxu0 0.0
        %430 = vmatpush2.xpose.msra.mxu0 0.0
        %431 = vmatprep.subr.mxu0 0.0
        %432 = vmatpush2.xpose.msra.mxu0 0.0
        %433 = vmatprep.subr.mxu0 0.0
        %434 = vmatpush2.xpose.msra.mxu0 0.0
        %435 = vmatprep.subr.mxu0 0.0
        %436 = vmatpush2.xpose.msra.mxu0 0.0
        %437 = vmatprep.subr.mxu0 0.0
        %438 = vmatpush2.xpose.msra.mxu0 0.0
        %439 = vmatprep.subr.mxu0 0.0
        %440 = vmatpush2.xpose.msra.mxu0 0.0
        %441 = vmatprep.subr.mxu0 0.0
        %442 = vmatpush2.xpose.msra.mxu0 0.0
        %443 = vmatprep.subr.mxu0 0.0
        %444 = vmatpush2.xpose.msra.mxu0 0.0
        %445 = vmatprep.subr.mxu0 0.0
        %446 = vmatpush2.xpose.msra.mxu0 0.0
        %447 = vmatprep.subr.mxu0 0.0
        %448 = vmatpush2.xpose.msra.mxu0 0.0
        %449 = vmatprep.subr.mxu0 0.0
        %450 = vmatpush2.xpose.msra.mxu0 0.0
        %451 = vmatprep.subr.mxu0 0.0
        %452 = vmatpush2.xpose.msra.mxu0 0.0
        %453 = vmatprep.subr.mxu0 0.0
        %454 = vmatpush2.xpose.msra.mxu0 0.0
        %455 = vmatprep.subr.mxu0 0.0
        %456 = vmatpush2.xpose.msra.mxu0 0.0
        %457 = vmatprep.mubr.f32.mxu0 0.0
        %458 = vmatmul.mubr.f32.gmra.mxu0 %v340
        %v459 = vpop.f32.mrf.mxu0
        %v460 = vadd.f32 %v336, %v459
        %v461 = vpop.f32.mrf.mxu0
        %462 = vmatprep.mubr.f32.mxu0 0.0
        %463 = vmatmul.mubr.f32.gmra.mxu0 %v343
        %v464 = vpop.f32.mrf.mxu0
        %v465 = vadd.f32 %v336, %v464
        %v466 = vpop.f32.mrf.mxu0
        %467 = vdwg.mxu0
        %v468 = vsub.f32 0.0, %v460
        %v469 = vsub.f32 0.0, %v465
        %v470 = vmul.f32 %v468, 1.442695
        %v471 = vpow.pop %v470
        %v472 = vmul.f32 %v469, 1.442695
        %v473 = vpow.pop %v472
        %v474 = vadd.f32 %v471, 1.0
        %v475 = vadd.f32 %v473, 1.0
        %v476 = vrcp.pop %v474
        %v477 = vmul.f32 1.0, %v476
        %v478 = vrcp.pop %v475
        %v479 = vmul.f32 1.0, %v478
        %v480 = vmul.f32 %v460, %v477
        %v481 = vmul.f32 %v465, %v479
        %v482 = vmul.f32 %v480, %v330
        %v483 = vmul.f32 %v481, %v331
        %484 = vst [vmem:[%s279] sm:$0xff] %v482
        %485 = vst [vmem:[%s279 + $0x8] sm:$0xff] %v483
        %s486 = sand.u32 %s157, 1
        %s487 = scalar_lea.sflag [#allocation3], %s486
        %s488 = sand.u32 %s157, 1
        %s489 = smul.addr %s488, 16
        %s490 = scalar_lea.vmem [#allocation2], %s489
        // Predicated region
        $region37: #{tpu_custom_call.1} parent=35 // pred_check
          %p491 = pneg %p167
        $region38: #{tpu_custom_call.1} parent=35 // pred_check_branch
          %493 = sbr.rel (%p491) target = $region40
        $region39: #{tpu_custom_call.1} parent=35 // pred_region
          %s494 = smul.u32 2, %s23
          %s496 = ssub.s32 256, 256
          %497 = vsyncadd %s487, %s496
          %s498 = sadd.s32 %s24, %s494
          %s499 = smul.addr %s498, 128
          %s500 = scalar_lea.hbm %s4, %s499
          %s501 = sshll.u32 %s490, 4
          %s502 = int_to_ptr.vmem [resolvable:$true] %s501
          %507 = dma.vmem_to_hbm [thread:$0]  %s502, 256, %s500, %s487, 128, 128, 8
        $region40: #{tpu_custom_call.1} parent=35 // pred_fallthru
          _
      $region36: #{tpu_custom_call.1} parent=5 // pred_fallthru
        _
      %p508 = scmp.le.s32.totalorder 2, %s13
      // Predicated region
      $region41: #{tpu_custom_call.1} parent=5 // pred_check
        %p509 = pneg %p508
      $region42: #{tpu_custom_call.1} parent=5 // pred_check_branch
        %511 = sbr.rel (%p509) target = $region44
      $region43: #{tpu_custom_call.1} parent=5 // pred_region
        %s512 = ssub.s32 %s13, 2
        // Predicated region
        $region45: #{tpu_custom_call.1} parent=43 // pred_check
          %p513 = pneg %p173
        $region46: #{tpu_custom_call.1} parent=43 // pred_check_branch
          %515 = sbr.rel (%p513) target = $region48
        $region47: #{tpu_custom_call.1} parent=43 // pred_region
          %s516 = sand.u32 %s158, 1
          %s517 = scalar_lea.sflag [#allocation3], %s516
          %s518 = sand.u32 %s158, 1
          %s519 = smul.addr %s518, 16
          %s520 = scalar_lea.vmem [#allocation2], %s519
          %521 = dma.done %s517, 256
        $region48: #{tpu_custom_call.1} parent=43 // pred_fallthru
          _
      $region44: #{tpu_custom_call.1} parent=5 // pred_fallthru
        _
    $region6: #{tpu_custom_call.1} parent=1 // loop_footer
      %s17 = sadd.s32 1, %s13
    $region7: #{tpu_custom_call.1} parent=1 // loop_footer_branch
      %12 = sbr.rel target = $region3
    $region8: #{tpu_custom_call.1} parent=1 // loop_exit
      _
    %522 = vsyncpa [#allocation3], 1
    %s523 = scalar_lea.sflag [#allocation3], 1
    %524 = vsyncpa %s523, 1

</llo_original>
